<compile_context>
chip_gen: v5e
topology: v5e:2x2
jax: 0.10.0
libtpu: 0.0.40
codegen_flags: <defaults>
</compile_context>

<pallas_src>
import jax
import jax.numpy as jnp
from jax.experimental import pallas as pl
from jax.experimental.pallas import tpu as pltpu


_TM_MAX = 512    # max batch-tile rows (f32)
_TK_MAX = 2048   # max reduction-tile width


def _choose_tiles(B, F):
    TM = B if B <= _TM_MAX else _TM_MAX
    TK = F if F <= _TK_MAX else _TK_MAX
    return TM, TK


def _pad_to(n, m):
    return (n + m - 1) // m * m


def _linear_bias_kernel(x_ref, w_ref, b_ref, o_ref, acc_ref):
    # x_ref: (TM, TK)  w_ref: (TK, C)  b_ref: (1, C)  o_ref: (TM, C)
    # acc_ref: (TM, C) f32 scratch, resident across the K grid axis.
    k = pl.program_id(1)

    @pl.when(k == 0)
    def _init():
        acc_ref[...] = jnp.zeros_like(acc_ref)

    acc_ref[...] += jnp.dot(x_ref[...], w_ref[...],
                            preferred_element_type=jnp.float32)

    @pl.when(k == pl.num_programs(1) - 1)
    def _store():
        o_ref[...] = (acc_ref[...]
                      + b_ref[...].astype(jnp.float32)).astype(o_ref.dtype)


def prepare_params(weight, bias):
    """One-time parameter prep (call at setup, not per forward).

    weight: (num_class, nfeatr) PyTorch layout -> (F_pad, num_class), with the
    feature axis zero-padded to the reduction tile so the forward path never
    copies / transposes the weight again.
    """
    C, F = weight.shape
    _, TK = _choose_tiles(1, F)
    F_pad = _pad_to(F, TK)
    w_fc = weight.T                              # one-time transpose
    if F_pad != F:
        w_fc = jnp.pad(w_fc, ((0, F_pad - F), (0, 0)))
    return w_fc, bias.reshape(1, C)


def classifier_forward_pallas(latent, w_fc, b2d):
    """Pallas path. latent: (B, F), w_fc: (F_pad, C), b2d: (1, C)."""
    B, F = latent.shape
    F_pad, C = w_fc.shape
    TM, TK = _choose_tiles(B, F)
    B_pad = _pad_to(B, TM)

    x = latent
    if B_pad != B or F_pad != F:
        x = jnp.pad(x, ((0, B_pad - B), (0, F_pad - F)))

    grid = (B_pad // TM, F_pad // TK)

    out = pl.pallas_call(
        _linear_bias_kernel,
        out_shape=jax.ShapeDtypeStruct((B_pad, C), latent.dtype),
        grid=grid,
        in_specs=[
            pl.BlockSpec((TM, TK), lambda i, k: (i, k)),   # streamed batch tile
            pl.BlockSpec((TK, C), lambda i, k: (k, 0)),    # weight: K-tiled, VMEM-resident over i
            pl.BlockSpec((1, C), lambda i, k: (0, 0)),     # bias: fully resident
        ],
        out_specs=pl.BlockSpec((TM, C), lambda i, k: (i, 0)),
        scratch_shapes=[pltpu.VMEM((TM, C), jnp.float32)],
        compiler_params=pltpu.CompilerParams(
            dimension_semantics=("parallel", "arbitrary"),
            vmem_limit_bytes=32 * 1024 * 1024,
        ),
    )(x, w_fc, b2d)

    return out[:B] if B_pad != B else out


def classifier_forward(latent, w_fc, b2d):
    """Dispatcher: tiny problems go to plain XLA (fuses for free); large ones
    use the tiled Pallas kernel."""
    B, F = latent.shape
    C = w_fc.shape[1]
    if B * F * C < (1 << 18):   # fixed pallas_call cost would dominate
        y = jnp.dot(latent, w_fc[:F], preferred_element_type=jnp.float32)
        return (y + b2d[0].astype(jnp.float32)).astype(latent.dtype)
    return classifier_forward_pallas(latent, w_fc, b2d)


if __name__ == "__main__":
    # Small shapes consistent with the module: nfeatr=32 features, 8 classes.
    batch, nfeatr, num_class = 8, 32, 8

    key = jax.random.PRNGKey(0)
    k_x, k_w, k_b = jax.random.split(key, 3)

    # Deterministic parameter init (mimics PyTorch Linear uniform bound).
    bound = 1.0 / (nfeatr ** 0.5)
    weight = jax.random.uniform(k_w, (num_class, nfeatr), jnp.float32,
                                minval=-bound, maxval=bound)
    bias = jax.random.uniform(k_b, (num_class,), jnp.float32,
                              minval=-bound, maxval=bound)
    latent = jax.random.normal(k_x, (batch, nfeatr), jnp.float32)

    # One-time parameter preparation (weight transpose happens here, not per call).
    w_fc, b2d = prepare_params(weight, bias)

    # Exercise the Pallas kernel directly.
    out = classifier_forward_pallas(latent, w_fc, b2d)
    out = jax.block_until_ready(out)

    # Correctness check against plain-JAX reference.
    ref = latent @ weight.T + bias
    assert out.shape == (batch, num_class)
    assert jnp.allclose(out, ref, atol=1e-5, rtol=1e-5)

    # Dispatcher path (XLA at this tiny size) must also match.
    out2 = jax.block_until_ready(classifier_forward(latent, w_fc, b2d))
    assert jnp.allclose(out2, ref, atol=1e-5, rtol=1e-5)

    print("KERNEL_OK")
</pallas_src>

<mosaic_0001>
module attributes {stable_mosaic.version = 11 : i64} {
  func.func @_linear_bias_kernel(%arg0: i32, %arg1: i32, %arg2: memref<8x32xf32, #tpu.memory_space<vmem>>, %arg3: memref<32x8xf32, #tpu.memory_space<vmem>>, %arg4: memref<1x8xf32, #tpu.memory_space<vmem>>, %arg5: memref<8x8xf32, #tpu.memory_space<vmem>>, %arg6: memref<8x8xf32, #tpu.memory_space<vmem>>) attributes {dimension_semantics = [#tpu.dimension_semantics<parallel>, #tpu.dimension_semantics<arbitrary>], iteration_bounds = array<i64: 1, 1>, scalar_prefetch = 0 : i64, scratch_operands = 1 : i64, tpu.core_type = #tpu.core_type<tc>, window_params = [{transform_indices = @transform_0, window_bounds = array<i64: 8, 32>}, {transform_indices = @transform_1, window_bounds = array<i64: 32, 8>}, {pipeline_mode = #tpu.pipeline_mode<synchronous>, transform_indices = @transform_2, window_bounds = array<i64: 1, 8>}, {transform_indices = @transform_3, window_bounds = array<i64: 8, 8>}]} {
    %c0_i32 = arith.constant 0 : i32
    %0 = arith.cmpi eq, %arg1, %c0_i32 : i32
    %1 = arith.extui %0 : i1 to i32
    %c0_i32_0 = arith.constant 0 : i32
    %2 = arith.cmpi ne, %1, %c0_i32_0 : i32
    scf.if %2 {
      %cst_10 = arith.constant 0.000000e+00 : f32
      %12 = vector.broadcast %cst_10 : f32 to vector<8x8xf32>
      %c0_11 = arith.constant 0 : index
      %c0_12 = arith.constant 0 : index
      %13 = vector.load %arg6[%c0_11, %c0_12] : memref<8x8xf32, #tpu.memory_space<vmem>>, vector<8x8xf32>
      tpu.vector_store %arg6[%c0_11, %c0_12], %12 {strides = array<i32>} : memref<8x8xf32, #tpu.memory_space<vmem>>, vector<8x8xf32>,
    } else {
    }
    %c0 = arith.constant 0 : index
    %c0_1 = arith.constant 0 : index
    %3 = vector.load %arg6[%c0, %c0_1] : memref<8x8xf32, #tpu.memory_space<vmem>>, vector<8x8xf32>
    %c0_2 = arith.constant 0 : index
    %c0_3 = arith.constant 0 : index
    %4 = vector.load %arg2[%c0_2, %c0_3] : memref<8x32xf32, #tpu.memory_space<vmem>>, vector<8x32xf32>
    %c0_4 = arith.constant 0 : index
    %c0_5 = arith.constant 0 : index
    %5 = vector.load %arg3[%c0_4, %c0_5] : memref<32x8xf32, #tpu.memory_space<vmem>>, vector<32x8xf32>
    %cst = arith.constant dense<0.000000e+00> : vector<8x8xf32>
    %6 = tpu.matmul %4, %5, %cst {dimension_numbers = #tpu.dot_dimension_numbers<[1], [0], [0], [1], [0, 0, 1, 1], [], []>} : vector<8x32xf32>, vector<32x8xf32>, vector<8x8xf32> -> vector<8x8xf32>
    %7 = arith.addf %3, %6 : vector<8x8xf32>
    %c0_6 = arith.constant 0 : index
    %c0_7 = arith.constant 0 : index
    %8 = vector.load %arg6[%c0_6, %c0_7] : memref<8x8xf32, #tpu.memory_space<vmem>>, vector<8x8xf32>
    tpu.vector_store %arg6[%c0_6, %c0_7], %7 {strides = array<i32>} : memref<8x8xf32, #tpu.memory_space<vmem>>, vector<8x8xf32>,
    %c0_i32_8 = arith.constant 0 : i32
    %9 = arith.cmpi eq, %arg1, %c0_i32_8 : i32
    %10 = arith.extui %9 : i1 to i32
    %c0_i32_9 = arith.constant 0 : i32
    %11 = arith.cmpi ne, %10, %c0_i32_9 : i32
    scf.if %11 {
      %c0_10 = arith.constant 0 : index
      %c0_11 = arith.constant 0 : index
      %12 = vector.load %arg6[%c0_10, %c0_11] : memref<8x8xf32, #tpu.memory_space<vmem>>, vector<8x8xf32>
      %c0_12 = arith.constant 0 : index
      %c0_13 = arith.constant 0 : index
      %13 = vector.load %arg4[%c0_12, %c0_13] : memref<1x8xf32, #tpu.memory_space<vmem>>, vector<1x8xf32>
      %14 = vector.broadcast %13 : vector<1x8xf32> to vector<8x8xf32>
      %15 = arith.addf %12, %14 : vector<8x8xf32>
      %c0_14 = arith.constant 0 : index
      %c0_15 = arith.constant 0 : index
      %16 = vector.load %arg5[%c0_14, %c0_15] : memref<8x8xf32, #tpu.memory_space<vmem>>, vector<8x8xf32>
      tpu.vector_store %arg5[%c0_14, %c0_15], %15 {strides = array<i32>} : memref<8x8xf32, #tpu.memory_space<vmem>>, vector<8x8xf32>,
    } else {
    }
    return
  }
  func.func @transform_0(%arg0: i32, %arg1: i32) -> (i32, i32) {
    %c0_i32 = arith.constant 0 : i32
    return %arg0, %arg1 : i32, i32
  }
  func.func @transform_1(%arg0: i32, %arg1: i32) -> (i32, i32) {
    %c0_i32 = arith.constant 0 : i32
    %c0_i32_0 = arith.constant 0 : i32
    return %arg1, %c0_i32 : i32, i32
  }
  func.func @transform_2(%arg0: i32, %arg1: i32) -> (i32, i32) {
    %c0_i32 = arith.constant 0 : i32
    %c0_i32_0 = arith.constant 0 : i32
    %c0_i32_1 = arith.constant 0 : i32
    return %c0_i32, %c0_i32_0 : i32, i32
  }
  func.func @transform_3(%arg0: i32, %arg1: i32) -> (i32, i32) {
    %c0_i32 = arith.constant 0 : i32
    %c0_i32_0 = arith.constant 0 : i32
    return %arg0, %c0_i32 : i32, i32
  }
}

</mosaic_0001>

<llo_original>
// kernel: tpu_custom_call.1
$region0: #{tpu_custom_call.1}
  #allocation0 [shape = 'u32[]', space=smem, size = 0x4, offset = 0x4, fixed_abs, tag = 'smem constant byte address 0x4 - core index']
  #allocation1 [shape = 'u32[72,128]{1,0:T(1,128)}', space=vmem, size = 0x9000, scoped, tag = 'internal scratch']
  #allocation2 [shape = 'f32[8,8]{1,0:T(8,128)}', space=vmem, size = 0x1000, scoped, tag = 'scratch operand']
  %s0 = inlined_call_operand.vmem [shape: f32[8,32], index: 0, kind: input, shape index: {}]
  %s1 = inlined_call_operand.vmem [shape: f32[32,8], index: 1, kind: input, shape index: {}]
  %s2 = inlined_call_operand.vmem [shape: f32[1,8], index: 2, kind: input, shape index: {}]
  %s3 = inlined_call_operand.hbm [shape: f32[8,8], index: 3, kind: output, shape index: {}]
  %s4 = sld [smem:[#allocation0]]
  $region30: #{tpu_custom_call.1} parent=0
    _
  %s6 = ssub.s32 1, %s4
  %s7 = scalar_select 0, %s6, %s4
  $region1: #{tpu_custom_call.1} parent=0
    #allocation3 [shape = 'u8[4096]{0}', space=vmem, size = 0x1000, scoped, tag = 'output window, operand 0, single buffered']
    #allocation4 [shape = 's32[1]{0}', space=sflag, size = 0x4, scoped, tag = 'scoped memory for tpu_custom_call.1']
    %8 = vsyncpa [#allocation4], 0
    // Predicated region
    $region2: #{tpu_custom_call.1} parent=1 // pred_check
      _
    $region3: #{tpu_custom_call.1} parent=1 // pred_check_branch
      %10 = sbr.rel (0) target = $region5
    $region4: #{tpu_custom_call.1} parent=1 // pred_region
      _
    $region5: #{tpu_custom_call.1} parent=1 // pred_fallthru
      _
    // Predicated region
    $region6: #{tpu_custom_call.1} parent=1 // pred_check
      _
    $region7: #{tpu_custom_call.1} parent=1 // pred_check_branch
      %12 = sbr.rel (0) target = $region9
    $region8: #{tpu_custom_call.1} parent=1 // pred_region
      _
    $region9: #{tpu_custom_call.1} parent=1 // pred_fallthru
      _
    // Predicated region
    $region10: #{tpu_custom_call.1} parent=1 // pred_check
      _
    $region11: #{tpu_custom_call.1} parent=1 // pred_check_branch
      %14 = sbr.rel (0) target = $region13
    $region12: #{tpu_custom_call.1} parent=1 // pred_region
      _
    $region13: #{tpu_custom_call.1} parent=1 // pred_fallthru
      _
    %p15 = scmp.eq.s32.totalorder 0, 0
    // Predicated region
    $region14: #{tpu_custom_call.1} parent=1 // pred_check
      %p16 = pneg %p15
    $region15: #{tpu_custom_call.1} parent=1 // pred_check_branch
      %18 = sbr.rel (%p16) target = $region17
    $region16: #{tpu_custom_call.1} parent=1 // pred_region
      %vm19 = vcmask 64512
      %20 = vst.msk [vmem:[#allocation2] sm:$0xff] %vm19, 0.0
    $region17: #{tpu_custom_call.1} parent=1 // pred_fallthru
      _
    %v21 = vld [vmem:[#allocation2] sm:$0xff]
    %v22 = vld [vmem:[%s0] sm:$0xff]
    %v23 = vld [vmem:[%s1] sm:$0xff]
    %v24 = vld [vmem:[%s1 + $0x8] sm:$0xff]
    %v25 = vld [vmem:[%s1 + $0x10] sm:$0xff]
    %v26 = vld [vmem:[%s1 + $0x18] sm:$0xff]
    %vm27 = vcmask 261120
    %v29 = vsel %vm27, %v22, 0
    %31 = vmatpush.msra.mxu0 0.0
    %32 = vmatpush.msra.mxu0 0.0
    %33 = vmatpush.msra.mxu0 0.0
    %34 = vmatpush.msra.mxu0 0.0
    %35 = vmatpush.msra.mxu0 0.0
    %36 = vmatpush.msra.mxu0 0.0
    %37 = vmatpush.msra.mxu0 0.0
    %38 = vmatpush.msra.mxu0 0.0
    %39 = vmatpush.msra.mxu0 0.0
    %40 = vmatpush.msra.mxu0 0.0
    %41 = vmatpush.msra.mxu0 0.0
    %42 = vmatpush.msra.mxu0 0.0
    %43 = vmatpush.msra.mxu0 %v26
    %44 = vmatpush.msra.mxu0 %v25
    %45 = vmatpush.msra.mxu0 %v24
    %46 = vmatpush.msra.mxu0 %v23
    %47 = vmatmul.f32.gmra.mxu0 %v29
    %v48 = vpop.f32.mrf.mxu0
    %v49 = vadd.f32 0.0, %v48
    %50 = vdwg.mxu0
    %v51 = vadd.f32 %v21, %v49
    %vm52 = vcmask 64512
    %53 = vst.msk [vmem:[#allocation2] sm:$0xff] %vm52, %v51
    // Predicated region
    $region18: #{tpu_custom_call.1} parent=1 // pred_check
      %p54 = pneg %p15
    $region19: #{tpu_custom_call.1} parent=1 // pred_check_branch
      %56 = sbr.rel (%p54) target = $region21
    $region20: #{tpu_custom_call.1} parent=1 // pred_region
      %v57 = vld [vmem:[#allocation2] sm:$0xff]
      %v58 = vld [vmem:[%s2] sm:$0x1]
      %v60 = vperm.slane %v58, 0
      %v62 = vadd.f32 %v57, %v60
      %63 = vst.msk [vmem:[#allocation3] sm:$0xff] %vm52, %v62
    $region21: #{tpu_custom_call.1} parent=1 // pred_fallthru
      _
    // Predicated region
    $region22: #{tpu_custom_call.1} parent=1 // pred_check
      _
    $region23: #{tpu_custom_call.1} parent=1 // pred_check_branch
      %65 = sbr.rel (0) target = $region25
    $region24: #{tpu_custom_call.1} parent=1 // pred_region
      %67 = vsyncadd [#allocation4], 0
      %s69 = sshll.u32 [#allocation3], 4
      %s70 = int_to_ptr.vmem [resolvable:$true] %s69
      %s71 = sshll.u32 %s3, 4
      %s72 = int_to_ptr.hbm [resolvable:$true] %s71
      %74 = dma.vmem_to_hbm [thread:$0]  %s70, 128, %s72, [#allocation4]
    $region25: #{tpu_custom_call.1} parent=1 // pred_fallthru
      _
    // Predicated region
    $region26: #{tpu_custom_call.1} parent=1 // pred_check
      _
    $region27: #{tpu_custom_call.1} parent=1 // pred_check_branch
      %76 = sbr.rel (0) target = $region29
    $region28: #{tpu_custom_call.1} parent=1 // pred_region
      %78 = dma.done [#allocation4], 128
    $region29: #{tpu_custom_call.1} parent=1 // pred_fallthru
      _
    %79 = vsyncpa [#allocation4], 1

</llo_original>
